<compile_context>
chip_gen: v6e
topology: v6e:2x2x1
jax: 0.10.0
libtpu: 0.0.40
codegen_flags: <defaults>
</compile_context>

<pallas_src>
import functools

import numpy as np
import jax
import jax.numpy as jnp
from jax.experimental import pallas as pl
from jax.experimental.pallas import tpu as pltpu


def _ceil_div(a, b):
    return -(-a // b)


def _yolo_kernel(p_ref, io_ref, *, nc, nx, stride, anchors):
    """Decode one (R, S_TILE) slab, R = na*(nc+5), S_TILE spatial lanes.

    p_ref  : VMEM (R, S_TILE)  raw predictions (rows = anchor-major, channel-minor)
    io_ref : VMEM (R, S_TILE)  decoded output
    """
    R, s_tile = p_ref.shape
    C = nc + 5
    na = R // C

    x = p_ref[...].astype(jnp.float32)

    # Transcendentals over the full tile (extra EUP work is free: kernel is HBM-bound).
    sig = jax.nn.sigmoid(x)
    ex = jnp.exp(x)

    # ---- spatial grid offsets from a lane iota (no extra DMA input) ----
    s_base = (pl.program_id(1) * s_tile).astype(jnp.float32)
    lane = jax.lax.broadcasted_iota(jnp.int32, (1, s_tile), 1).astype(jnp.float32) + s_base
    gy = jnp.floor(lane / float(nx))        # exact for these small integers in f32
    gx = lane - gy * float(nx)

    # ---- static per-row masks / constants (rows = a*C + c, a,c known statically) ----
    rows = jax.lax.broadcasted_iota(jnp.int32, (R, 1), 0)

    def row_mask(offset):
        m = rows == offset
        for a in range(1, na):
            m = m | (rows == a * C + offset)
        return m

    is_x = row_mask(0)
    is_xy = is_x | row_mask(1)
    is_wh = row_mask(2) | row_mask(3)

    # raw anchors (== anchor_vec * stride), baked as compile-time constants
    anc = jnp.ones((R, 1), jnp.float32)     # 1.0 (not 0.0) avoids inf*0 in dead rows
    for a, (w, h) in enumerate(anchors):
        anc = jnp.where(rows == a * C + 2, jnp.float32(w), anc)
        anc = jnp.where(rows == a * C + 3, jnp.float32(h), anc)

    # ---- fused decode, single full-tile (unmasked) store ----
    grid_off = jnp.where(is_x, gx, gy)                    # (R, s_tile)
    xy = sig * stride + grid_off * stride                 # (sigmoid + grid) * stride
    wh = ex * anc                                         # exp * anchor_vec * stride
    out = jnp.where(is_xy, xy, jnp.where(is_wh, wh, sig))
    if nc == 1:
        out = jnp.where(row_mask(5), jnp.float32(1.0), out)
    io_ref[...] = out.astype(io_ref.dtype)


def _spatial_tiling(S, bs, row_bytes):
    """Pick (s_tile, n_chunks): big lane-dense blocks, VMEM-safe, >= 2 grid steps."""
    max_block_bytes = 4 * 1024 * 1024          # per-input block; 2*(in+out) << 32 MiB scoped VMEM (v7x-safe)
    n_s = max(1, _ceil_div(S * row_bytes, max_block_bytes))
    if bs * n_s < 2 and S > 128:               # keep both v7x TensorCores busy
        n_s = 2
    s_tile = _ceil_div(S, n_s)
    s_tile = _ceil_div(s_tile, 128) * 128      # lane-dense: multiple of 128
    n_s = _ceil_div(S, s_tile)
    return s_tile, n_s


def yolo_layer_forward(p, anchors, nc, img_size, want_p=True):
    """Pallas implementation of YOLOLayer.forward (eval / non-ONNX branch).

    p       : (bs, na*(nc+5), ny, nx) conv output (f32 or bf16)
    anchors : static (na, 2) anchor sizes (list / numpy / jnp — host-readable)
    returns : (io, p_perm) with io: (bs, na*ny*nx, nc+5), p_perm: (bs,na,ny,nx,nc+5)
              (pass want_p=False to skip the p_perm transpose when it is unused)
    """
    bs, ch, ny, nx = p.shape
    anchors_np = np.asarray(anchors, dtype=np.float32).reshape(-1, 2)  # static module param
    na = anchors_np.shape[0]
    C = nc + 5
    assert ch == na * C
    S = ny * nx
    R = na * C
    stride = float(img_size) / float(max(ny, nx))

    s_tile, n_s = _spatial_tiling(S, bs, R * jnp.dtype(p.dtype).itemsize)
    S_pad = s_tile * n_s

    # --- glue: flatten channels+spatial; pad lanes to a multiple of 128 ---
    p3 = p.reshape(bs, R, S)
    if S_pad != S:
        p3 = jnp.pad(p3, ((0, 0), (0, 0), (0, S_pad - S)))

    kernel = functools.partial(
        _yolo_kernel, nc=nc, nx=nx, stride=stride,
        anchors=tuple((float(w), float(h)) for w, h in anchors_np))

    io3 = pl.pallas_call(
        kernel,
        out_shape=jax.ShapeDtypeStruct((bs, R, S_pad), p.dtype),
        grid=(bs, n_s),
        in_specs=[pl.BlockSpec((None, R, s_tile), lambda b, s: (b, 0, s))],
        out_specs=pl.BlockSpec((None, R, s_tile), lambda b, s: (b, 0, s)),
        compiler_params=pltpu.CompilerParams(
            dimension_semantics=("parallel", "parallel")),
    )(p3)

    if S_pad != S:
        io3 = io3[..., :S]

    # --- glue: (..., C)-last transposes stay in XLA (C << 128 lanes; doing them
    # in-kernel would force masked stores).  p_perm is optional for inference. ---
    io = jnp.transpose(io3.reshape(bs, na, C, ny, nx), (0, 1, 3, 4, 2))
    io = io.reshape(bs, na * ny * nx, C)
    if want_p:
        p_perm = jnp.transpose(p.reshape(bs, na, C, ny, nx), (0, 1, 3, 4, 2))
        return io, p_perm
    return io, None


def yolo_layer_reference(p, anchors, nc, img_size):
    """Pure-JAX reference mirroring the PyTorch eval forward."""
    bs, ch, ny, nx = p.shape
    na = anchors.shape[0]
    C = nc + 5
    stride = float(img_size) / float(max(ny, nx))

    p5 = jnp.transpose(p.reshape(bs, na, C, ny, nx), (0, 1, 3, 4, 2))  # (bs,na,ny,nx,C)

    ys, xs = jnp.meshgrid(jnp.arange(ny), jnp.arange(nx), indexing="ij")
    grid_xy = jnp.stack([xs, ys], axis=-1).astype(jnp.float32).reshape(1, 1, ny, nx, 2)
    anchor_wh = (anchors / stride).reshape(1, na, 1, 1, 2)

    xy = (jax.nn.sigmoid(p5[..., 0:2]) + grid_xy) * stride
    wh = (jnp.exp(p5[..., 2:4]) * anchor_wh) * stride
    rest = jax.nn.sigmoid(p5[..., 4:])
    if nc == 1:
        rest = rest.at[..., 1].set(1.0)
    io = jnp.concatenate([xy, wh, rest], axis=-1)
    return io.reshape(bs, -1, C), p5


if __name__ == "__main__":
    anchors = [[10.0, 13.0], [33.0, 23.0], [62.0, 45.0]]
    na = len(anchors)

    # --- test 1: multi-class, 128-aligned spatial ---
    bs, nc, ny, nx = 2, 2, 16, 16
    img_size = 512  # -> stride 32
    p = jax.random.normal(jax.random.PRNGKey(0), (bs, na * (nc + 5), ny, nx), dtype=jnp.float32)

    io, p_perm = yolo_layer_forward(p, anchors, nc, img_size)
    io = jax.block_until_ready(io)
    p_perm = jax.block_until_ready(p_perm)

    io_ref, p_ref = yolo_layer_reference(p, jnp.asarray(anchors, jnp.float32), nc, img_size)
    assert io.shape == (bs, na * ny * nx, nc + 5)
    assert p_perm.shape == (bs, na, ny, nx, nc + 5)
    assert jnp.allclose(io, io_ref, rtol=1e-5, atol=1e-4)
    assert jnp.allclose(p_perm, p_ref, rtol=1e-6, atol=1e-6)

    # --- test 2: single-class, non-128-multiple spatial (exercises lane padding,
    # the nc==1 override and the >=2-step split for bs=1) ---
    bs2, nc2, ny2, nx2 = 1, 1, 13, 13
    img_size2 = 416  # -> stride 32
    p2 = jax.random.normal(jax.random.PRNGKey(1), (bs2, na * (nc2 + 5), ny2, nx2),
                           dtype=jnp.float32)
    io2, p2_perm = yolo_layer_forward(p2, anchors, nc2, img_size2)
    io2 = jax.block_until_ready(io2)
    io2_ref, p2_ref = yolo_layer_reference(p2, jnp.asarray(anchors, jnp.float32), nc2, img_size2)
    assert jnp.allclose(io2, io2_ref, rtol=1e-5, atol=1e-4)
    assert jnp.allclose(p2_perm, p2_ref, rtol=1e-6, atol=1e-6)

    print("KERNEL_OK")
</pallas_src>

<mosaic_0001>
module attributes {stable_mosaic.version = 11 : i64} {
  func.func @_yolo_kernel(%arg0: i32, %arg1: i32, %arg2: memref<1x21x256xf32, #tpu.memory_space<vmem>>, %arg3: memref<1x21x256xf32, #tpu.memory_space<vmem>>) attributes {dimension_semantics = [#tpu.dimension_semantics<parallel>, #tpu.dimension_semantics<parallel>], iteration_bounds = array<i64: 2, 1>, scalar_prefetch = 0 : i64, scratch_operands = 0 : i64, tpu.core_type = #tpu.core_type<tc>, window_params = [{transform_indices = @transform_0, window_bounds = array<i64: 1, 21, 256>}, {transform_indices = @transform_1, window_bounds = array<i64: 1, 21, 256>}]} {
    %c0 = arith.constant 0 : index
    %c0_0 = arith.constant 0 : index
    %c0_1 = arith.constant 0 : index
    %0 = vector.load %arg2[%c0, %c0_0, %c0_1] : memref<1x21x256xf32, #tpu.memory_space<vmem>>, vector<1x21x256xf32>
    %1 = vector.shape_cast %0 : vector<1x21x256xf32> to vector<21x256xf32>
    %2 = arith.negf %1 : vector<21x256xf32>
    %3 = math.exp %2 : vector<21x256xf32>
    %cst = arith.constant 1.000000e+00 : f32
    %4 = vector.broadcast %cst : f32 to vector<21x256xf32>
    %5 = arith.addf %4, %3 : vector<21x256xf32>
    %6 = arith.divf %4, %5 : vector<21x256xf32>
    %7 = math.exp %1 : vector<21x256xf32>
    %c256_i32 = arith.constant 256 : i32
    %8 = arith.muli %arg1, %c256_i32 : i32
    %9 = arith.sitofp %8 : i32 to f32
    %10 = tpu.iota {dimensions = array<i32: 1>} : vector<1x256xi32>
    %11 = arith.sitofp %10 : vector<1x256xi32> to vector<1x256xf32>
    %12 = vector.broadcast %9 : f32 to vector<1x256xf32>
    %13 = arith.addf %11, %12 : vector<1x256xf32>
    %cst_2 = arith.constant 1.600000e+01 : f32
    %14 = vector.broadcast %cst_2 : f32 to vector<1x256xf32>
    %15 = arith.divf %13, %14 : vector<1x256xf32>
    %16 = math.floor %15 : vector<1x256xf32>
    %cst_3 = arith.constant 1.600000e+01 : f32
    %17 = vector.broadcast %cst_3 : f32 to vector<1x256xf32>
    %18 = arith.mulf %16, %17 : vector<1x256xf32>
    %19 = arith.subf %13, %18 : vector<1x256xf32>
    %20 = tpu.iota {dimensions = array<i32: 0>} : vector<21x1xi32>
    %c0_i32 = arith.constant 0 : i32
    %21 = vector.broadcast %c0_i32 : i32 to vector<21x1xi32>
    %22 = arith.cmpi eq, %20, %21 : vector<21x1xi32>
    %c7_i32 = arith.constant 7 : i32
    %23 = vector.broadcast %c7_i32 : i32 to vector<21x1xi32>
    %24 = arith.cmpi eq, %20, %23 : vector<21x1xi32>
    %25 = arith.ori %22, %24 : vector<21x1xi1>
    %c14_i32 = arith.constant 14 : i32
    %26 = vector.broadcast %c14_i32 : i32 to vector<21x1xi32>
    %27 = arith.cmpi eq, %20, %26 : vector<21x1xi32>
    %28 = arith.ori %25, %27 : vector<21x1xi1>
    %c1_i32 = arith.constant 1 : i32
    %29 = vector.broadcast %c1_i32 : i32 to vector<21x1xi32>
    %30 = arith.cmpi eq, %20, %29 : vector<21x1xi32>
    %c8_i32 = arith.constant 8 : i32
    %31 = vector.broadcast %c8_i32 : i32 to vector<21x1xi32>
    %32 = arith.cmpi eq, %20, %31 : vector<21x1xi32>
    %33 = arith.ori %30, %32 : vector<21x1xi1>
    %c15_i32 = arith.constant 15 : i32
    %34 = vector.broadcast %c15_i32 : i32 to vector<21x1xi32>
    %35 = arith.cmpi eq, %20, %34 : vector<21x1xi32>
    %36 = arith.ori %33, %35 : vector<21x1xi1>
    %37 = arith.ori %28, %36 : vector<21x1xi1>
    %c2_i32 = arith.constant 2 : i32
    %38 = vector.broadcast %c2_i32 : i32 to vector<21x1xi32>
    %39 = arith.cmpi eq, %20, %38 : vector<21x1xi32>
    %c9_i32 = arith.constant 9 : i32
    %40 = vector.broadcast %c9_i32 : i32 to vector<21x1xi32>
    %41 = arith.cmpi eq, %20, %40 : vector<21x1xi32>
    %42 = arith.ori %39, %41 : vector<21x1xi1>
    %c16_i32 = arith.constant 16 : i32
    %43 = vector.broadcast %c16_i32 : i32 to vector<21x1xi32>
    %44 = arith.cmpi eq, %20, %43 : vector<21x1xi32>
    %45 = arith.ori %42, %44 : vector<21x1xi1>
    %c3_i32 = arith.constant 3 : i32
    %46 = vector.broadcast %c3_i32 : i32 to vector<21x1xi32>
    %47 = arith.cmpi eq, %20, %46 : vector<21x1xi32>
    %c10_i32 = arith.constant 10 : i32
    %48 = vector.broadcast %c10_i32 : i32 to vector<21x1xi32>
    %49 = arith.cmpi eq, %20, %48 : vector<21x1xi32>
    %50 = arith.ori %47, %49 : vector<21x1xi1>
    %c17_i32 = arith.constant 17 : i32
    %51 = vector.broadcast %c17_i32 : i32 to vector<21x1xi32>
    %52 = arith.cmpi eq, %20, %51 : vector<21x1xi32>
    %53 = arith.ori %50, %52 : vector<21x1xi1>
    %54 = arith.ori %45, %53 : vector<21x1xi1>
    %cst_4 = arith.constant 1.000000e+00 : f32
    %55 = vector.broadcast %cst_4 : f32 to vector<21x1xf32>
    %c2_i32_5 = arith.constant 2 : i32
    %56 = vector.broadcast %c2_i32_5 : i32 to vector<21x1xi32>
    %57 = arith.cmpi eq, %20, %56 : vector<21x1xi32>
    %cst_6 = arith.constant 1.000000e+01 : f32
    %58 = vector.broadcast %cst_6 : f32 to vector<21x1xf32>
    %59 = arith.select %57, %58, %55 : vector<21x1xi1>, vector<21x1xf32>
    %c3_i32_7 = arith.constant 3 : i32
    %60 = vector.broadcast %c3_i32_7 : i32 to vector<21x1xi32>
    %61 = arith.cmpi eq, %20, %60 : vector<21x1xi32>
    %cst_8 = arith.constant 1.300000e+01 : f32
    %62 = vector.broadcast %cst_8 : f32 to vector<21x1xf32>
    %63 = arith.select %61, %62, %59 : vector<21x1xi1>, vector<21x1xf32>
    %c9_i32_9 = arith.constant 9 : i32
    %64 = vector.broadcast %c9_i32_9 : i32 to vector<21x1xi32>
    %65 = arith.cmpi eq, %20, %64 : vector<21x1xi32>
    %cst_10 = arith.constant 3.300000e+01 : f32
    %66 = vector.broadcast %cst_10 : f32 to vector<21x1xf32>
    %67 = arith.select %65, %66, %63 : vector<21x1xi1>, vector<21x1xf32>
    %c10_i32_11 = arith.constant 10 : i32
    %68 = vector.broadcast %c10_i32_11 : i32 to vector<21x1xi32>
    %69 = arith.cmpi eq, %20, %68 : vector<21x1xi32>
    %cst_12 = arith.constant 2.300000e+01 : f32
    %70 = vector.broadcast %cst_12 : f32 to vector<21x1xf32>
    %71 = arith.select %69, %70, %67 : vector<21x1xi1>, vector<21x1xf32>
    %c16_i32_13 = arith.constant 16 : i32
    %72 = vector.broadcast %c16_i32_13 : i32 to vector<21x1xi32>
    %73 = arith.cmpi eq, %20, %72 : vector<21x1xi32>
    %cst_14 = arith.constant 6.200000e+01 : f32
    %74 = vector.broadcast %cst_14 : f32 to vector<21x1xf32>
    %75 = arith.select %73, %74, %71 : vector<21x1xi1>, vector<21x1xf32>
    %c17_i32_15 = arith.constant 17 : i32
    %76 = vector.broadcast %c17_i32_15 : i32 to vector<21x1xi32>
    %77 = arith.cmpi eq, %20, %76 : vector<21x1xi32>
    %cst_16 = arith.constant 4.500000e+01 : f32
    %78 = vector.broadcast %cst_16 : f32 to vector<21x1xf32>
    %79 = arith.select %77, %78, %75 : vector<21x1xi1>, vector<21x1xf32>
    %80 = vector.shape_cast %28 : vector<21x1xi1> to vector<21x1xi1>
    %81 = vector.broadcast %80 : vector<21x1xi1> to vector<21x256xi1>
    %82 = vector.shape_cast %19 : vector<1x256xf32> to vector<1x256xf32>
    %83 = vector.broadcast %82 : vector<1x256xf32> to vector<21x256xf32>
    %84 = vector.shape_cast %16 : vector<1x256xf32> to vector<1x256xf32>
    %85 = vector.broadcast %84 : vector<1x256xf32> to vector<21x256xf32>
    %86 = arith.select %81, %83, %85 : vector<21x256xi1>, vector<21x256xf32>
    %cst_17 = arith.constant 3.200000e+01 : f32
    %87 = vector.broadcast %cst_17 : f32 to vector<21x256xf32>
    %88 = arith.mulf %6, %87 : vector<21x256xf32>
    %cst_18 = arith.constant 3.200000e+01 : f32
    %89 = vector.broadcast %cst_18 : f32 to vector<21x256xf32>
    %90 = arith.mulf %86, %89 : vector<21x256xf32>
    %91 = arith.addf %88, %90 : vector<21x256xf32>
    %92 = vector.broadcast %79 : vector<21x1xf32> to vector<21x256xf32>
    %93 = arith.mulf %7, %92 : vector<21x256xf32>
    %94 = vector.shape_cast %54 : vector<21x1xi1> to vector<21x1xi1>
    %95 = vector.broadcast %94 : vector<21x1xi1> to vector<21x256xi1>
    %96 = arith.select %95, %93, %6 : vector<21x256xi1>, vector<21x256xf32>
    %97 = vector.shape_cast %37 : vector<21x1xi1> to vector<21x1xi1>
    %98 = vector.broadcast %97 : vector<21x1xi1> to vector<21x256xi1>
    %99 = arith.select %98, %91, %96 : vector<21x256xi1>, vector<21x256xf32>
    %c0_19 = arith.constant 0 : index
    %c0_20 = arith.constant 0 : index
    %c0_21 = arith.constant 0 : index
    %100 = vector.load %arg3[%c0_19, %c0_20, %c0_21] : memref<1x21x256xf32, #tpu.memory_space<vmem>>, vector<1x21x256xf32>
    %101 = vector.shape_cast %100 : vector<1x21x256xf32> to vector<21x256xf32>
    %102 = vector.shape_cast %99 : vector<21x256xf32> to vector<1x21x256xf32>
    tpu.vector_store %arg3[%c0_19, %c0_20, %c0_21], %102 {strides = array<i32>} : memref<1x21x256xf32, #tpu.memory_space<vmem>>, vector<1x21x256xf32>,
    return
  }
  func.func @transform_0(%arg0: i32, %arg1: i32) -> (i32, i32, i32) {
    %c0_i32 = arith.constant 0 : i32
    %c0_i32_0 = arith.constant 0 : i32
    return %arg0, %c0_i32, %arg1 : i32, i32, i32
  }
  func.func @transform_1(%arg0: i32, %arg1: i32) -> (i32, i32, i32) {
    %c0_i32 = arith.constant 0 : i32
    %c0_i32_0 = arith.constant 0 : i32
    return %arg0, %c0_i32, %arg1 : i32, i32, i32
  }
}

</mosaic_0001>

<llo_original>
// kernel: tpu_custom_call.1
$region0: #{tpu_custom_call.1}
  #allocation0 [shape = 'u32[]', space=smem, size = 0x4, offset = 0x4, fixed_abs, tag = 'smem constant byte address 0x4 - core index']
  #allocation1 [shape = 'u32[144,128]{1,0:T(1,128)}', space=vmem, size = 0x12000, scoped, tag = 'internal scratch']
  %s0 = inlined_call_operand.vmem [shape: f32[2,21,256], index: 0, kind: input, shape index: {}]
  %s1 = inlined_call_operand.vmem [shape: f32[2,21,256], index: 1, kind: output, shape index: {}]
  %s2 = sld [smem:[#allocation0]]
  $region37: #{tpu_custom_call.1} parent=0
    _
  %s4 = ssub.s32 1, %s2
  %s5 = scalar_select 0, %s4, %s2
  loop: start=0, step=1, limit=4
  $region2: #{tpu_custom_call.1} parent=0 // loop_pre_header
    _
  $region3: #{tpu_custom_call.1} parent=0 // loop_header
    %s7 = sphi 0, %s11
    %p8 = scmp.ge.s32.totalorder %s7, 4
    %s14 = sphi 0, %s26
    %s15 = sphi 0, %s22
    %s16 = sphi 0, %s14
    %s17 = sphi 0, %s15
    %s18 = sphi 0, %s16
    %s19 = sphi 0, %s17
    %s31 = sphi 0, %s33
    %s34 = sphi 0, %s31
    %s35 = sphi 0, %s34
    %s51 = sphi 0, %s35
    %s59 = sphi 0, %s61
    %s62 = sphi 0, %s59
    %s63 = sphi 0, %s62
    %s79 = sphi 0, %s63
  $region4: #{tpu_custom_call.1} parent=0 // loop_header_branch
    %10 = sbr.rel (%p8) target = $region8
  $region5: #{tpu_custom_call.1} parent=0 // loop_body
    %s12 = ssub.s32 %s7, 1
    %s13 = ssub.s32 %s7, 2
    %s20 = sadd.s32 1, %s15
    %p21 = scmp.ge.s32.totalorder %s20, 1
    %s22 = scalar_select %p21, 0, %s20
    %s23 = sadd.s32 1, %s14
    %s24 = scalar_select %p21, %s23, %s14
    %p25 = scmp.ge.s32.totalorder %s24, 2
    %s26 = scalar_select %p25, 0, %s24
    %s27 = ssub.s32 %s14, %s26
    %s28 = ssub.s32 %s15, %s22
    %s29 = sor.u32 %s27, %s28
    %p30 = scmp.eq.s32.totalorder %s29, 0
    %s32 = sadd.s32 %s31, 1
    %s33 = scalar_select %p30, %s31, %s32
    %p36 = pneg %p30
    %p37 = scmp.eq.s32.totalorder %s7, 1
    %p38 = por %p36, %p37
    %p39 = scmp.ne.s32.totalorder %s31, %s34
    %p40 = scmp.eq.s32.totalorder %s7, 0
    %p41 = por %p39, %p40
    %p42 = scmp.ne.s32.totalorder %s31, %s34
    %p43 = scmp.eq.s32.totalorder %s12, 1
    %p44 = por %p42, %p43
    %p45 = scmp.ne.s32.totalorder %s34, %s35
    %p46 = scmp.eq.s32.totalorder %s12, 0
    %p47 = por %p45, %p46
    %p48 = scmp.ne.s32.totalorder %s34, %s35
    %p49 = scmp.eq.s32.totalorder %s13, 1
    %p50 = por %p48, %p49
    %p52 = scmp.ne.s32.totalorder %s35, %s51
    %p53 = scmp.eq.s32.totalorder %s13, 0
    %p54 = por %p52, %p53
    %s55 = ssub.s32 %s14, %s26
    %s56 = ssub.s32 %s15, %s22
    %s57 = sor.u32 %s55, %s56
    %p58 = scmp.eq.s32.totalorder %s57, 0
    %s60 = sadd.s32 %s59, 1
    %s61 = scalar_select %p58, %s59, %s60
    %p64 = pneg %p58
    %p65 = scmp.eq.s32.totalorder %s7, 1
    %p66 = por %p64, %p65
    %p67 = scmp.ne.s32.totalorder %s59, %s62
    %p68 = scmp.eq.s32.totalorder %s7, 0
    %p69 = por %p67, %p68
    %p70 = scmp.ne.s32.totalorder %s59, %s62
    %p71 = scmp.eq.s32.totalorder %s12, 1
    %p72 = por %p70, %p71
    %p73 = scmp.ne.s32.totalorder %s62, %s63
    %p74 = scmp.eq.s32.totalorder %s12, 0
    %p75 = por %p73, %p74
    %p76 = scmp.ne.s32.totalorder %s62, %s63
    %p77 = scmp.eq.s32.totalorder %s13, 1
    %p78 = por %p76, %p77
    %p80 = scmp.ne.s32.totalorder %s63, %s79
    %p81 = scmp.eq.s32.totalorder %s13, 0
    %p82 = por %p80, %p81
    %p83 = scmp.le.s32.totalorder 1, %s7
    %p84 = scmp.lt.s32.totalorder %s7, 3
    %p85 = pnand %p83, %p84
    %p86 = pneg %p85
    // Predicated region
    $region9: #{tpu_custom_call.1} parent=5 // pred_check
      _
    $region10: #{tpu_custom_call.1} parent=5 // pred_check_branch
      %88 = sbr.rel (%p85) target = $region12
    $region11: #{tpu_custom_call.1} parent=5 // pred_region
      %s89 = ssub.s32 %s7, 1
    $region12: #{tpu_custom_call.1} parent=5 // pred_fallthru
      _
    %p90 = scmp.lt.s32.totalorder %s7, 2
    // Predicated region
    $region13: #{tpu_custom_call.1} parent=5 // pred_check
      %p91 = pneg %p90
    $region14: #{tpu_custom_call.1} parent=5 // pred_check_branch
      %93 = sbr.rel (%p91) target = $region16
    $region15: #{tpu_custom_call.1} parent=5 // pred_region
      // Predicated region
      $region17: #{tpu_custom_call.1} parent=15 // pred_check
        %p94 = pneg %p41
      $region18: #{tpu_custom_call.1} parent=15 // pred_check_branch
        %96 = sbr.rel (%p94) target = $region20
      $region19: #{tpu_custom_call.1} parent=15 // pred_region
        %s97 = smul.u32 2, %s15
        %p98 = scmp.lt.s32.totalorder %s14, 1
        %s99 = scalar_select %p98, %s14, 1
        %p100 = scmp.lt.s32.totalorder %s97, 1
        %s101 = scalar_select %p100, %s97, 1
        %s102 = smul.addr %s99, 6
        %s103 = sadd.s32 %s101, %s102
        %s104 = smul.addr %s103, 8
        %s105 = scalar_lea.vmem %s0, %s104
        %s106 = smul.u32 2, %s15
      $region20: #{tpu_custom_call.1} parent=15 // pred_fallthru
        _
    $region16: #{tpu_custom_call.1} parent=5 // pred_fallthru
      _
    %p107 = scmp.le.s32.totalorder 1, %s7
    %p108 = scmp.lt.s32.totalorder %s7, 3
    %p109 = pnand %p107, %p108
    %p110 = pneg %p109
    // Predicated region
    $region21: #{tpu_custom_call.1} parent=5 // pred_check
      _
    $region22: #{tpu_custom_call.1} parent=5 // pred_check_branch
      %112 = sbr.rel (%p109) target = $region24
    $region23: #{tpu_custom_call.1} parent=5 // pred_region
      %s113 = ssub.s32 %s7, 1
      %s114 = smul.u32 2, %s17
      %p115 = scmp.lt.s32.totalorder %s16, 1
      %s116 = scalar_select %p115, %s16, 1
      %p117 = scmp.lt.s32.totalorder %s114, 1
      %s118 = scalar_select %p117, %s114, 1
      %s119 = smul.addr %s116, 6
      %s120 = sadd.s32 %s118, %s119
      %s121 = smul.addr %s120, 8
      %s122 = scalar_lea.vmem %s0, %s121
      %p123 = pneg %p47
      %p124 = pneg %p44
      %p125 = pneg %p75
      %p126 = pneg %p72
      %s127 = smul.u32 2, %s17
      %p128 = scmp.lt.s32.totalorder %s16, 1
      %s129 = scalar_select %p128, %s16, 1
      %p130 = scmp.lt.s32.totalorder %s127, 1
      %s131 = scalar_select %p130, %s127, 1
      %s132 = smul.addr %s129, 6
      %s133 = sadd.s32 %s131, %s132
      %s134 = smul.addr %s133, 8
      %s135 = scalar_lea.vmem %s1, %s134
      %s136 = smul.u32 2, %s17
      %p137 = scmp.lt.s32.totalorder %s16, 1
      %s138 = scalar_select %p137, %s16, 1
      %p139 = scmp.lt.s32.totalorder %s136, 1
      %s140 = scalar_select %p139, %s136, 1
      %s141 = smul.addr %s138, 6
      %s142 = sadd.s32 %s140, %s141
      %s143 = smul.addr %s142, 8
      %s144 = scalar_lea.vmem %s0, %s143
      %s145 = smul.u32 2, %s17
      %s146 = smul.u32 2, %s17
      %p147 = scmp.lt.s32.totalorder %s16, 1
      %s148 = scalar_select %p147, %s16, 1
      %p149 = scmp.lt.s32.totalorder %s146, 1
      %s150 = scalar_select %p149, %s146, 1
      %s151 = smul.addr %s148, 6
      %s152 = sadd.s32 %s150, %s151
      %s153 = smul.addr %s152, 8
      %s154 = scalar_lea.vmem %s1, %s153
      %s155 = smul.u32 2, %s17
      %v156 = vld [vmem:[%s144] sm:$0xff]
      %v157 = vld [vmem:[%s144 + $0x8] sm:$0xff]
      %v158 = vld [vmem:[%s144 + $0x10] sm:$0xff]
      %v159 = vld [vmem:[%s144 + $0x18] sm:$0xff]
      %v160 = vld [vmem:[%s144 + $0x20] sm:$0x1f]
      %v161 = vld [vmem:[%s144 + $0x28] sm:$0x1f]
      %v162 = vxor.u32 %v156, 2147483648
      %v163 = vxor.u32 %v157, 2147483648
      %v164 = vxor.u32 %v158, 2147483648
      %v165 = vxor.u32 %v159, 2147483648
      %v166 = vxor.u32 %v160, 2147483648
      %v167 = vxor.u32 %v161, 2147483648
      %v168 = vmul.f32 %v162, 1.442695
      %v169 = vpow.pop %v168
      %v170 = vmul.f32 %v163, 1.442695
      %v171 = vpow.pop %v170
      %v172 = vmul.f32 %v164, 1.442695
      %v173 = vpow.pop %v172
      %v174 = vmul.f32 %v165, 1.442695
      %v175 = vpow.pop %v174
      %v176 = vmul.f32 %v166, 1.442695
      %v177 = vpow.pop %v176
      %v178 = vmul.f32 %v167, 1.442695
      %v179 = vpow.pop %v178
      %v180 = vadd.f32 %v169, 1.0
      %v181 = vadd.f32 %v171, 1.0
      %v182 = vadd.f32 %v173, 1.0
      %v183 = vadd.f32 %v175, 1.0
      %v184 = vadd.f32 %v177, 1.0
      %v185 = vadd.f32 %v179, 1.0
      %v186 = vrcp.pop %v180
      %v187 = vmul.f32 1.0, %v186
      %v188 = vrcp.pop %v181
      %v189 = vmul.f32 1.0, %v188
      %v190 = vrcp.pop %v182
      %v191 = vmul.f32 1.0, %v190
      %v192 = vrcp.pop %v183
      %v193 = vmul.f32 1.0, %v192
      %v194 = vrcp.pop %v184
      %v195 = vmul.f32 1.0, %v194
      %v196 = vrcp.pop %v185
      %v197 = vmul.f32 1.0, %v196
      %v198 = vmul.f32 %v156, 1.442695
      %v199 = vpow.pop %v198
      %v200 = vmul.f32 %v157, 1.442695
      %v201 = vpow.pop %v200
      %v202 = vmul.f32 %v158, 1.442695
      %v203 = vpow.pop %v202
      %v204 = vmul.f32 %v159, 1.442695
      %v205 = vpow.pop %v204
      %v206 = vmul.f32 %v160, 1.442695
      %v207 = vpow.pop %v206
      %v208 = vmul.f32 %v161, 1.442695
      %v209 = vpow.pop %v208
      %s210 = smul.u32 %s17, 256
      %s211 = scvt.s32.f32 %s210
      %v212 = vlaneseq
      %v213 = vand.u32 %v212, 127
      %v214 = vadd.s32 %v213, 128
      %v215 = vcvt.s32.f32 %v213
      %v216 = vcvt.s32.f32 %v214
      %v217 = vstv %s211
      %v218 = vadd.f32 %v215, %v217
      %v219 = vadd.f32 %v216, %v217
      %v220 = vrcp.pop 16.0
      %v221 = vmul.f32 %v218, %v220
      %v222 = vmul.f32 %v219, %v220
      %v223 = vfloor.f32 %v221
      %v224 = vfloor.f32 %v222
      %v225 = vmul.f32 %v223, 16.0
      %v226 = vmul.f32 %v224, 16.0
      %v227 = vsub.f32 %v218, %v225
      %v228 = vsub.f32 %v219, %v226
      %v229 = vlaneseq
      %v230 = vshrl.u32 %v229, 7
      %v231 = vadd.s32 %v230, 8
      %v232 = vadd.s32 %v230, 16
      %vm233 = vcmp.eq.s32.totalorder %v230, 0
      %vm234 = vcmp.eq.s32.totalorder %v231, 0
      %vm235 = vcmp.eq.s32.totalorder %v232, 0
      %vm236 = vcmp.eq.s32.totalorder %v230, 7
      %vm237 = vcmp.eq.s32.totalorder %v231, 7
      %vm238 = vcmp.eq.s32.totalorder %v232, 7
      %vm239 = vmor %vm233, %vm236
      %vm240 = vmor %vm234, %vm237
      %vm241 = vmor %vm235, %vm238
      %vm242 = vcmp.eq.s32.totalorder %v230, 14
      %vm243 = vcmp.eq.s32.totalorder %v231, 14
      %vm244 = vcmp.eq.s32.totalorder %v232, 14
      %vm245 = vmor %vm239, %vm242
      %vm246 = vmor %vm240, %vm243
      %vm247 = vmor %vm241, %vm244
      %vm248 = vcmp.eq.s32.totalorder %v230, 1
      %vm249 = vcmp.eq.s32.totalorder %v231, 1
      %vm250 = vcmp.eq.s32.totalorder %v232, 1
      %vm251 = vcmp.eq.s32.totalorder %v230, 8
      %vm252 = vcmp.eq.s32.totalorder %v231, 8
      %vm253 = vcmp.eq.s32.totalorder %v232, 8
      %vm254 = vmor %vm248, %vm251
      %vm255 = vmor %vm249, %vm252
      %vm256 = vmor %vm250, %vm253
      %vm257 = vcmp.eq.s32.totalorder %v230, 15
      %vm258 = vcmp.eq.s32.totalorder %v231, 15
      %vm259 = vcmp.eq.s32.totalorder %v232, 15
      %vm260 = vmor %vm254, %vm257
      %vm261 = vmor %vm255, %vm258
      %vm262 = vmor %vm256, %vm259
      %vm263 = vmor %vm245, %vm260
      %vm264 = vmor %vm246, %vm261
      %vm265 = vmor %vm247, %vm262
      %vm266 = vcmp.eq.s32.totalorder %v230, 2
      %vm267 = vcmp.eq.s32.totalorder %v231, 2
      %vm268 = vcmp.eq.s32.totalorder %v232, 2
      %vm269 = vcmp.eq.s32.totalorder %v230, 9
      %vm270 = vcmp.eq.s32.totalorder %v231, 9
      %vm271 = vcmp.eq.s32.totalorder %v232, 9
      %vm272 = vmor %vm266, %vm269
      %vm273 = vmor %vm267, %vm270
      %vm274 = vmor %vm268, %vm271
      %vm275 = vcmp.eq.s32.totalorder %v230, 16
      %vm276 = vcmp.eq.s32.totalorder %v231, 16
      %vm277 = vcmp.eq.s32.totalorder %v232, 16
      %vm278 = vmor %vm272, %vm275
      %vm279 = vmor %vm273, %vm276
      %vm280 = vmor %vm274, %vm277
      %vm281 = vcmp.eq.s32.totalorder %v230, 3
      %vm282 = vcmp.eq.s32.totalorder %v231, 3
      %vm283 = vcmp.eq.s32.totalorder %v232, 3
      %vm284 = vcmp.eq.s32.totalorder %v230, 10
      %vm285 = vcmp.eq.s32.totalorder %v231, 10
      %vm286 = vcmp.eq.s32.totalorder %v232, 10
      %vm287 = vmor %vm281, %vm284
      %vm288 = vmor %vm282, %vm285
      %vm289 = vmor %vm283, %vm286
      %vm290 = vcmp.eq.s32.totalorder %v230, 17
      %vm291 = vcmp.eq.s32.totalorder %v231, 17
      %vm292 = vcmp.eq.s32.totalorder %v232, 17
      %vm293 = vmor %vm287, %vm290
      %vm294 = vmor %vm288, %vm291
      %vm295 = vmor %vm289, %vm292
      %vm296 = vmor %vm278, %vm293
      %vm297 = vmor %vm279, %vm294
      %vm298 = vmor %vm280, %vm295
      %v299 = vsel %vm266, 10.0, 1.0
      %v300 = vsel %vm267, 10.0, 1.0
      %v301 = vsel %vm268, 10.0, 1.0
      %v302 = vsel %vm281, 13.0, %v299
      %v303 = vsel %vm282, 13.0, %v300
      %v304 = vsel %vm283, 13.0, %v301
      %v305 = vsel %vm269, 33.0, %v302
      %v306 = vsel %vm270, 33.0, %v303
      %v307 = vsel %vm271, 33.0, %v304
      %v308 = vsel %vm284, 23.0, %v305
      %v309 = vsel %vm285, 23.0, %v306
      %v310 = vsel %vm286, 23.0, %v307
      %v311 = vsel %vm275, 62.0, %v308
      %v312 = vsel %vm276, 62.0, %v309
      %v313 = vsel %vm277, 62.0, %v310
      %v314 = vsel %vm290, 45.0, %v311
      %v315 = vsel %vm291, 45.0, %v312
      %v316 = vsel %vm292, 45.0, %v313
      %v317 = vsel %vm245, 1, 0
      %v318 = vsel %vm246, 1, 0
      %v319 = vsel %vm247, 1, 0
      %vm320 = vcmp.eq.s32.totalorder %v317, 1
      %vm321 = vcmp.eq.s32.totalorder %v318, 1
      %vm322 = vcmp.eq.s32.totalorder %v319, 1
      %v323 = vsel %vm320, %v227, %v223
      %v324 = vsel %vm320, %v228, %v224
      %v325 = vsel %vm321, %v227, %v223
      %v326 = vsel %vm321, %v228, %v224
      %v327 = vsel %vm322, %v227, %v223
      %v328 = vsel %vm322, %v228, %v224
      %v329 = vmul.f32 %v187, 32.0
      %v330 = vmul.f32 %v189, 32.0
      %v331 = vmul.f32 %v191, 32.0
      %v332 = vmul.f32 %v193, 32.0
      %v333 = vmul.f32 %v195, 32.0
      %v334 = vmul.f32 %v197, 32.0
      %v335 = vmul.f32 %v323, 32.0
      %v336 = vmul.f32 %v324, 32.0
      %v337 = vmul.f32 %v325, 32.0
      %v338 = vmul.f32 %v326, 32.0
      %v339 = vmul.f32 %v327, 32.0
      %v340 = vmul.f32 %v328, 32.0
      %v341 = vadd.f32 %v329, %v335
      %v342 = vadd.f32 %v330, %v336
      %v343 = vadd.f32 %v331, %v337
      %v344 = vadd.f32 %v332, %v338
      %v345 = vadd.f32 %v333, %v339
      %v346 = vadd.f32 %v334, %v340
      %v347 = vmul.f32 %v199, %v314
      %v348 = vmul.f32 %v201, %v314
      %v349 = vmul.f32 %v203, %v315
      %v350 = vmul.f32 %v205, %v315
      %v351 = vmul.f32 %v207, %v316
      %v352 = vmul.f32 %v209, %v316
      %v353 = vsel %vm296, 1, 0
      %v354 = vsel %vm297, 1, 0
      %v355 = vsel %vm298, 1, 0
      %vm356 = vcmp.eq.s32.totalorder %v353, 1
      %vm357 = vcmp.eq.s32.totalorder %v354, 1
      %vm358 = vcmp.eq.s32.totalorder %v355, 1
      %v359 = vsel %vm356, %v347, %v187
      %v360 = vsel %vm356, %v348, %v189
      %v361 = vsel %vm357, %v349, %v191
      %v362 = vsel %vm357, %v350, %v193
      %v363 = vsel %vm358, %v351, %v195
      %v364 = vsel %vm358, %v352, %v197
      %v365 = vsel %vm263, 1, 0
      %v366 = vsel %vm264, 1, 0
      %v367 = vsel %vm265, 1, 0
      %vm368 = vcmp.eq.s32.totalorder %v365, 1
      %vm369 = vcmp.eq.s32.totalorder %v366, 1
      %vm370 = vcmp.eq.s32.totalorder %v367, 1
      %v371 = vsel %vm368, %v341, %v359
      %v372 = vsel %vm368, %v342, %v360
      %v373 = vsel %vm369, %v343, %v361
      %v374 = vsel %vm369, %v344, %v362
      %v375 = vsel %vm370, %v345, %v363
      %v376 = vsel %vm370, %v346, %v364
      %377 = vst [vmem:[%s154] sm:$0xff] %v371
      %378 = vst [vmem:[%s154 + $0x8] sm:$0xff] %v372
      %379 = vst [vmem:[%s154 + $0x10] sm:$0xff] %v373
      %380 = vst [vmem:[%s154 + $0x18] sm:$0xff] %v374
      %381 = vst [vmem:[%s154 + $0x20] sm:$0x1f] %v375
      %382 = vst [vmem:[%s154 + $0x28] sm:$0x1f] %v376
      %s383 = smul.u32 2, %s17
      %p384 = scmp.lt.s32.totalorder %s16, 1
      %s385 = scalar_select %p384, %s16, 1
      %p386 = scmp.lt.s32.totalorder %s383, 1
      %s387 = scalar_select %p386, %s383, 1
      %s388 = smul.addr %s385, 6
      %s389 = sadd.s32 %s387, %s388
      %s390 = smul.addr %s389, 8
      %s391 = scalar_lea.vmem %s1, %s390
      // Predicated region
      $region25: #{tpu_custom_call.1} parent=23 // pred_check
        %p392 = pneg %p72
      $region26: #{tpu_custom_call.1} parent=23 // pred_check_branch
        %394 = sbr.rel (%p392) target = $region28
      $region27: #{tpu_custom_call.1} parent=23 // pred_region
        %s395 = smul.u32 2, %s17
      $region28: #{tpu_custom_call.1} parent=23 // pred_fallthru
        _
    $region24: #{tpu_custom_call.1} parent=5 // pred_fallthru
      _
    %p396 = scmp.le.s32.totalorder 2, %s7
    // Predicated region
    $region29: #{tpu_custom_call.1} parent=5 // pred_check
      %p397 = pneg %p396
    $region30: #{tpu_custom_call.1} parent=5 // pred_check_branch
      %399 = sbr.rel (%p397) target = $region32
    $region31: #{tpu_custom_call.1} parent=5 // pred_region
      %s400 = ssub.s32 %s7, 2
      // Predicated region
      $region33: #{tpu_custom_call.1} parent=31 // pred_check
        %p401 = pneg %p78
      $region34: #{tpu_custom_call.1} parent=31 // pred_check_branch
        %403 = sbr.rel (%p401) target = $region36
      $region35: #{tpu_custom_call.1} parent=31 // pred_region
        %s404 = smul.u32 2, %s19
        %p405 = scmp.lt.s32.totalorder %s18, 1
        %s406 = scalar_select %p405, %s18, 1
        %p407 = scmp.lt.s32.totalorder %s404, 1
        %s408 = scalar_select %p407, %s404, 1
        %s409 = smul.addr %s406, 6
        %s410 = sadd.s32 %s408, %s409
        %s411 = smul.addr %s410, 8
        %s412 = scalar_lea.vmem %s1, %s411
      $region36: #{tpu_custom_call.1} parent=31 // pred_fallthru
        _
    $region32: #{tpu_custom_call.1} parent=5 // pred_fallthru
      _
  $region6: #{tpu_custom_call.1} parent=0 // loop_footer
    %s11 = sadd.s32 1, %s7
  $region7: #{tpu_custom_call.1} parent=0 // loop_footer_branch
    %6 = sbr.rel target = $region3
  $region8: #{tpu_custom_call.1} parent=0 // loop_exit
    _

</llo_original>
